<compile_context>
chip_gen: v7x
topology: tpu7x:2x2x1
jax: 0.10.0
libtpu: 0.0.40
codegen_flags: <defaults>
</compile_context>

<pallas_src>
import math
import functools

import jax
import jax.numpy as jnp
from jax.experimental import pallas as pl
from jax.experimental.pallas import tpu as pltpu


# ----------------------------- math helpers -----------------------------

def _gelu(x):
    # BERT-pytorch GELU (tanh approximation); x*x*x instead of x**3 (cheaper VPU sequence).
    return 0.5 * x * (1.0 + jnp.tanh(math.sqrt(2.0 / math.pi)
                                     * (x + 0.044715 * x * x * x)))


def _layernorm(x, g, b, eps=1e-6, use_eup=False):
    # Matches BERT-pytorch LayerNorm: unbiased std, (std + eps) denominator.
    mean = jnp.mean(x, axis=-1, keepdims=True)
    var = jnp.sum((x - mean) ** 2, axis=-1, keepdims=True) / (x.shape[-1] - 1)
    denom = jnp.sqrt(var) + eps
    if use_eup:                               # inside the Pallas kernel: EUP reciprocal
        inv = pl.reciprocal(denom, approx=True)
    else:                                     # pure-JAX reference path: exact divide
        inv = 1.0 / denom
    return g * (x - mean) * inv + b


# ----------------------------- embedding kernel (the spec module) -----------------------------

def bert_embedding_kernel(tok_ids_ref, seg_ids_ref,       # scalar-prefetch (SMEM), used in index_maps
                          tok_row_ref, seg_row_ref, pe_row_ref,
                          out_ref):
    # Each grid step receives exactly the (1,1,H) rows selected by the data-dependent
    # index maps; the kernel body is a pure VPU add (no MXU, no one-hot).
    out_ref[...] = tok_row_ref[...] + seg_row_ref[...] + pe_row_ref[...]
    # TODO(synk): dropout omitted (rate = 0.0 in this config -> identity).


def bert_embedding(tokens, segments, params):
    """BERTEmbedding forward.  Returns lane-dense (B*S, H) f32 activations."""
    B, S = tokens.shape
    V, H = params["tok_emb"].shape
    NSEG = params["seg_emb"].shape[0]
    pe = params["pe"][:S]                                  # matches self.pe[:, :x.size(1)]

    # Tables presented as (rows, 1, H) so the gathered row block (1, 1, H) keeps its last two
    # dims equal to the full array dims (respects the (8,128) block-shape rule).
    tok3 = params["tok_emb"].reshape(V, 1, H)
    seg3 = params["seg_emb"].reshape(NSEG, 1, H)
    pe3 = pe.reshape(S, 1, H)

    grid_spec = pltpu.PrefetchScalarGridSpec(
        num_scalar_prefetch=2,                             # tokens, segments -> SMEM
        grid=(B, S),
        in_specs=[
            # data-dependent row gather: block index = token id / segment id / position
            pl.BlockSpec((1, 1, H), lambda b, s, tok, seg: (tok[b, s], 0, 0)),
            pl.BlockSpec((1, 1, H), lambda b, s, tok, seg: (seg[b, s], 0, 0)),
            pl.BlockSpec((1, 1, H), lambda b, s, tok, seg: (s, 0, 0)),
        ],
        out_specs=pl.BlockSpec((1, 1, H), lambda b, s, tok, seg: (b * S + s, 0, 0)),
    )

    out = pl.pallas_call(
        bert_embedding_kernel,
        out_shape=jax.ShapeDtypeStruct((B * S, 1, H), jnp.float32),
        grid_spec=grid_spec,
        compiler_params=pltpu.CompilerParams(
            dimension_semantics=("parallel", "arbitrary")),
    )(tokens, segments, tok3, seg3, pe3)

    # lane-dense 2-D activations; the (B, S, H) view is pure metadata in the wrapper.
    return out.reshape(B * S, H)


# ----------------------------- transformer block kernel -----------------------------

PARAM_ORDER = ["ln1_g", "ln1_b", "wqkv", "bqkv", "wo", "bo",
               "ln2_g", "ln2_b", "w1", "b1", "w2", "b2"]


def transformer_block_kernel(n_heads, seq_len,
                             x_ref, bias_ref,
                             ln1_g_ref, ln1_b_ref,
                             wqkv_ref, bqkv_ref, wo_ref, bo_ref,
                             ln2_g_ref, ln2_b_ref,
                             w1_ref, b1_ref, w2_ref, b2_ref,
                             out_ref):
    M, H = x_ref.shape                       # M = Bt * S (batch folded into the matmul M dim)
    S = seq_len
    Bt = M // S
    d_k = H // n_heads
    bf16 = jnp.bfloat16

    x = x_ref[...]                           # (M, H) f32
    key_bias = bias_ref[...]                 # (Bt, 1, S) f32 additive key mask

    # --- self-attention sublayer: x + attn(LN(x)) ---
    h1 = _layernorm(x, ln1_g_ref[...], ln1_b_ref[...], use_eup=True)
    # fused QKV projection: one (M, H) @ (H, 3H) MXU push.
    # 1/sqrt(d_k) is pre-folded into the Q columns of wqkv/bqkv at init.
    qkv = jnp.dot(h1.astype(bf16), wqkv_ref[...],
                  preferred_element_type=jnp.float32) + bqkv_ref[...]      # (M, 3H)
    qkv3 = qkv.reshape(Bt, S, 3 * H)

    def split_heads(base):
        # one relayout for ALL sequences/heads -> (Bt*n_heads, S, d_k), bf16
        hs = [qkv3[:, :, base + h * d_k: base + (h + 1) * d_k] for h in range(n_heads)]
        t = jnp.stack(hs, axis=1)            # (Bt, n_heads, S, d_k)
        return t.reshape(Bt * n_heads, S, d_k).astype(bf16)

    q = split_heads(0)
    k = split_heads(H)
    v = split_heads(2 * H)

    # single batched einsum over all (sequence, head) pairs
    scores = jnp.einsum('zqd,zkd->zqk', q, k,
                        preferred_element_type=jnp.float32)                 # (Bt*h, S, S)
    scores = scores.reshape(Bt, n_heads, S, S) + key_bias[:, None, :, :]
    m = jnp.max(scores, axis=-1, keepdims=True)
    e = jnp.exp(scores - m)
    w = e * pl.reciprocal(jnp.sum(e, axis=-1, keepdims=True), approx=True)  # f32 softmax, EUP rcp
    w = w.reshape(Bt * n_heads, S, S)

    ctx = jnp.einsum('zqk,zkd->zqd', w.astype(bf16), v,
                     preferred_element_type=jnp.float32)                    # (Bt*h, S, d_k)
    ctx4 = ctx.reshape(Bt, n_heads, S, d_k)
    # merge heads back onto 128 lanes once, then a single K=H output projection (full MXU fill)
    ctx_m = jnp.concatenate([ctx4[:, h] for h in range(n_heads)], axis=-1)  # (Bt, S, H)
    ctx_m = ctx_m.reshape(M, H)
    attn = jnp.dot(ctx_m.astype(bf16), wo_ref[...],
                   preferred_element_type=jnp.float32) + bo_ref[...]
    x = x + attn

    # --- feed-forward sublayer: x + FFN(LN(x)) ---
    h2 = _layernorm(x, ln2_g_ref[...], ln2_b_ref[...], use_eup=True)
    u = jnp.dot(h2.astype(bf16), w1_ref[...],
                preferred_element_type=jnp.float32) + b1_ref[...]
    ff = jnp.dot(_gelu(u).astype(bf16), w2_ref[...],
                 preferred_element_type=jnp.float32) + b2_ref[...]
    x = x + ff

    # TODO(synk): dropout omitted (rate = 0.0 in this config -> identity)
    out_ref[...] = x.astype(out_ref.dtype)   # lane-dense (M, 128) store, no in-kernel reshape


def _num_tensorcores_per_chip():
    # Single-TC (v5e/v6e): best to run grid=1 with Bt=B (M=128 fills the MXU, no per-step
    # grid overhead).  Dual-TC chips (v7x / megacore v4/v5p): keep >=2 "parallel" blocks.
    try:
        kind = jax.devices()[0].device_kind.lower()
    except Exception:
        return 1
    if any(t in kind for t in ("v7", "7x", "v4", "v5p")):
        return 2
    return 1


def transformer_block(x2, attn_bias, params, n_heads, seq_len, block_b=None):
    M, H = x2.shape
    B = M // seq_len
    FF = params["w1"].shape[1]

    if block_b is None:
        block_b = B if _num_tensorcores_per_chip() == 1 else max(1, B // 2)
    Bt = min(block_b, B)
    assert B % Bt == 0
    n_blocks = B // Bt

    kern = functools.partial(transformer_block_kernel, n_heads, seq_len)

    flops = 2 * B * seq_len * (4 * H * H + 2 * seq_len * H + 2 * H * FF)
    transcendentals = B * seq_len * (n_heads * seq_len + FF)
    bytes_accessed = (4 * (2 * M * H + B * seq_len)              # f32 activations in/out + bias
                      + 2 * (4 * H * H + 2 * H * FF)             # bf16 weights
                      + 4 * (3 * H + H + FF + H + 4 * H))        # f32 biases / LN params

    args = [x2, attn_bias] + [params[k] for k in PARAM_ORDER]

    def build(use_buffered):
        def const_spec(a):
            idx = lambda b, _nd=a.ndim: (0,) * _nd
            if use_buffered:
                # constant weights/biases: block index never changes across the grid,
                # single-buffer them (halves resident weight VMEM, matters most on v7x).
                return pl.BlockSpec(a.shape, idx, pipeline_mode=pl.Buffered(1))
            return pl.BlockSpec(a.shape, idx)

        in_specs = ([pl.BlockSpec((Bt * seq_len, H), lambda b: (b, 0)),
                     pl.BlockSpec((Bt, 1, seq_len), lambda b: (b, 0, 0))]
                    + [const_spec(params[k]) for k in PARAM_ORDER])

        return pl.pallas_call(
            kern,
            out_shape=jax.ShapeDtypeStruct((M, H), x2.dtype),
            grid=(n_blocks,),
            in_specs=in_specs,
            out_specs=pl.BlockSpec((Bt * seq_len, H), lambda b: (b, 0)),
            compiler_params=pltpu.CompilerParams(
                dimension_semantics=("parallel",),
                vmem_limit_bytes=32 * 1024 * 1024),              # << v7x's 64 MiB physical VMEM
            cost_estimate=pl.CostEstimate(flops=flops,
                                          transcendentals=transcendentals,
                                          bytes_accessed=bytes_accessed),
        )

    try:
        return build(True)(*args)
    except Exception:
        # TODO(synk): fallback for jax versions without BlockSpec.pipeline_mode / Buffered(1).
        return build(False)(*args)


# ----------------------------- embeddings / forward glue -----------------------------

def positional_embedding(max_len, d_model):
    position = jnp.arange(max_len, dtype=jnp.float32)[:, None]
    div_term = jnp.exp(jnp.arange(0, d_model, 2, dtype=jnp.float32)
                       * -(math.log(10000.0) / d_model))
    pe = jnp.zeros((max_len, d_model), jnp.float32)
    pe = pe.at[:, 0::2].set(jnp.sin(position * div_term))
    pe = pe.at[:, 1::2].set(jnp.cos(position * div_term))
    return pe


def bert_forward(tokens, segments, params, n_heads, block_b=None):
    B, S = tokens.shape
    # TODO(synk): fuse the embedding into the first transformer block to avoid one
    # (B,S,H) HBM round-trip between pallas_calls.
    x2 = bert_embedding(tokens, segments, params)                # (B*S, H), lane-dense
    # additive key mask computed ONCE for all layers: (B, 1, S) f32
    attn_bias = jnp.where(tokens > 0, 0.0, -1e9).astype(jnp.float32)[:, None, :]
    for layer in params["layers"]:
        x2 = transformer_block(x2, attn_bias, layer, n_heads, S, block_b=block_b)
    H = x2.shape[-1]
    return x2.reshape(B, S, H)


# ----------------------------- parameter init -----------------------------

def init_params(key, vocab_size, hidden, n_layers, n_heads):
    ff = hidden * 4
    d_k = hidden // n_heads
    inv_sqrt_dk = 1.0 / math.sqrt(d_k)
    k_tok, k_seg, *k_layers = jax.random.split(key, 2 + n_layers)

    tok = 0.02 * jax.random.normal(k_tok, (vocab_size, hidden), jnp.float32)
    tok = tok.at[0].set(0.0)                    # padding_idx=0
    seg = jnp.zeros((8, hidden), jnp.float32)   # 3 segments padded to 8 rows (row 0 = padding_idx)
    seg = seg.at[1:3].set(0.02 * jax.random.normal(k_seg, (2, hidden), jnp.float32))
    # NOTE: valid segment ids are {0,1,2}; ids >= 3 would silently select a zero row.

    def lin(k, din, dout):
        w = 0.02 * jax.random.normal(k, (din, dout), jnp.float32)
        b = jnp.zeros((1, dout), jnp.float32)
        return w, b

    layers = []
    for lk in k_layers:
        ks = jax.random.split(lk, 6)
        wq, bq = lin(ks[0], hidden, hidden)
        wk, bk = lin(ks[1], hidden, hidden)
        wv, bv = lin(ks[2], hidden, hidden)
        wo, bo = lin(ks[3], hidden, hidden)
        w1, b1 = lin(ks[4], hidden, ff)
        w2, b2 = lin(ks[5], ff, hidden)
        layers.append(dict(
            ln1_g=jnp.ones((1, hidden), jnp.float32),
            ln1_b=jnp.zeros((1, hidden), jnp.float32),
            # 1/sqrt(d_k) folded into the Q columns (weight AND bias) at init
            wqkv=jnp.concatenate([wq * inv_sqrt_dk, wk, wv], axis=1).astype(jnp.bfloat16),
            bqkv=jnp.concatenate([bq * inv_sqrt_dk, bk, bv], axis=1),
            wo=wo.astype(jnp.bfloat16),
            bo=bo,
            ln2_g=jnp.ones((1, hidden), jnp.float32),
            ln2_b=jnp.zeros((1, hidden), jnp.float32),
            w1=w1.astype(jnp.bfloat16), b1=b1,
            w2=w2.astype(jnp.bfloat16), b2=b2,
        ))

    return dict(tok_emb=tok, seg_emb=seg,
                pe=positional_embedding(512, hidden), layers=layers)


# ----------------------------- pure-JAX reference -----------------------------

def ref_block(x2, attn_bias, p, n_heads, seq_len):
    M, H = x2.shape
    S = seq_len
    B = M // S
    d_k = H // n_heads
    bf16 = jnp.bfloat16

    h1 = _layernorm(x2, p["ln1_g"], p["ln1_b"])
    qkv = jnp.dot(h1.astype(bf16), p["wqkv"],
                  preferred_element_type=jnp.float32) + p["bqkv"]

    def split(t):
        return t.reshape(B, S, n_heads, d_k).transpose(0, 2, 1, 3)

    q, k, v = split(qkv[:, :H]), split(qkv[:, H:2 * H]), split(qkv[:, 2 * H:])
    # no explicit 1/sqrt(d_k): it is folded into wqkv/bqkv
    scores = jnp.einsum('bhqd,bhkd->bhqk', q.astype(bf16), k.astype(bf16),
                        preferred_element_type=jnp.float32)
    scores = scores + attn_bias[:, None, :, :]
    w = jax.nn.softmax(scores, axis=-1)
    ctx = jnp.einsum('bhqk,bhkd->bhqd', w.astype(bf16), v.astype(bf16),
                     preferred_element_type=jnp.float32)
    ctx = ctx.transpose(0, 2, 1, 3).reshape(M, H)
    attn = jnp.dot(ctx.astype(bf16), p["wo"], preferred_element_type=jnp.float32) + p["bo"]
    x2 = x2 + attn

    h2 = _layernorm(x2, p["ln2_g"], p["ln2_b"])
    u = jnp.dot(h2.astype(bf16), p["w1"], preferred_element_type=jnp.float32) + p["b1"]
    ff = jnp.dot(_gelu(u).astype(bf16), p["w2"], preferred_element_type=jnp.float32) + p["b2"]
    return x2 + ff


def bert_reference(tokens, segments, params, n_heads):
    B, S = tokens.shape
    x = (params["tok_emb"][tokens]
         + params["pe"][None, :S, :]
         + params["seg_emb"][segments])
    x2 = x.reshape(B * S, -1)
    attn_bias = jnp.where(tokens > 0, 0.0, -1e9).astype(jnp.float32)[:, None, :]
    for layer in params["layers"]:
        x2 = ref_block(x2, attn_bias, layer, n_heads, S)
    return x2.reshape(B, S, -1)


# ----------------------------- main -----------------------------

if __name__ == "__main__":
    VOCAB, HIDDEN, N_LAYERS, N_HEADS = 128, 128, 2, 4   # lane-dense hidden (=128)
    B, S = 4, 32

    key = jax.random.PRNGKey(0)
    k_tok, k_seg, k_par = jax.random.split(key, 3)

    tokens = jax.random.randint(k_tok, (B, S), 1, VOCAB, dtype=jnp.int32)
    tokens = tokens.at[:, -5:].set(0)                   # padding to exercise the mask
    segments = jax.random.randint(k_seg, (B, S), 1, 3, dtype=jnp.int32)
    segments = segments.at[:, -5:].set(0)

    params = init_params(k_par, VOCAB, HIDDEN, N_LAYERS, N_HEADS)

    # --- spec module: BERTEmbedding forward (Pallas row-gather kernel, exact) ---
    emb = jax.block_until_ready(bert_embedding(tokens, segments, params))
    emb_ref = (params["tok_emb"][tokens]
               + params["pe"][None, :S, :]
               + params["seg_emb"][segments])
    assert emb.shape == (B * S, HIDDEN)
    assert jnp.allclose(emb.reshape(B, S, HIDDEN), emb_ref, atol=1e-6, rtol=1e-6), \
        "embedding mismatch"

    # --- full stack (embedding kernel + fused transformer-block kernels) ---
    out = jax.block_until_ready(bert_forward(tokens, segments, params, N_HEADS))
    ref = bert_reference(tokens, segments, params, N_HEADS)
    assert out.shape == (B, S, HIDDEN)
    assert jnp.allclose(out, ref, atol=5e-3, rtol=5e-3), "mismatch vs JAX reference"

    print("KERNEL_OK")
</pallas_src>

<mosaic_0001>
module attributes {stable_mosaic.version = 11 : i64} {
  func.func @bert_embedding_kernel(%arg0: i32, %arg1: i32, %arg2: memref<4x32xi32, #tpu.memory_space<smem>>, %arg3: memref<4x32xi32, #tpu.memory_space<smem>>, %arg4: memref<1x1x128xf32, #tpu.memory_space<vmem>>, %arg5: memref<1x1x128xf32, #tpu.memory_space<vmem>>, %arg6: memref<1x1x128xf32, #tpu.memory_space<vmem>>, %arg7: memref<1x1x128xf32, #tpu.memory_space<vmem>>) attributes {dimension_semantics = [#tpu.dimension_semantics<parallel>, #tpu.dimension_semantics<arbitrary>], iteration_bounds = array<i64: 4, 32>, scalar_prefetch = 2 : i64, scratch_operands = 0 : i64, tpu.core_type = #tpu.core_type<tc>, window_params = [{transform_indices = @transform_0, window_bounds = array<i64: 1, 1, 128>}, {transform_indices = @transform_1, window_bounds = array<i64: 1, 1, 128>}, {transform_indices = @transform_2, window_bounds = array<i64: 1, 1, 128>}, {transform_indices = @transform_3, window_bounds = array<i64: 1, 1, 128>}]} {
    %c0 = arith.constant 0 : index
    %c0_0 = arith.constant 0 : index
    %c0_1 = arith.constant 0 : index
    %0 = vector.load %arg4[%c0, %c0_0, %c0_1] : memref<1x1x128xf32, #tpu.memory_space<vmem>>, vector<1x1x128xf32>
    %c0_2 = arith.constant 0 : index
    %c0_3 = arith.constant 0 : index
    %c0_4 = arith.constant 0 : index
    %1 = vector.load %arg5[%c0_2, %c0_3, %c0_4] : memref<1x1x128xf32, #tpu.memory_space<vmem>>, vector<1x1x128xf32>
    %2 = arith.addf %0, %1 : vector<1x1x128xf32>
    %c0_5 = arith.constant 0 : index
    %c0_6 = arith.constant 0 : index
    %c0_7 = arith.constant 0 : index
    %3 = vector.load %arg6[%c0_5, %c0_6, %c0_7] : memref<1x1x128xf32, #tpu.memory_space<vmem>>, vector<1x1x128xf32>
    %4 = arith.addf %2, %3 : vector<1x1x128xf32>
    %c0_8 = arith.constant 0 : index
    %c0_9 = arith.constant 0 : index
    %c0_10 = arith.constant 0 : index
    %5 = vector.load %arg7[%c0_8, %c0_9, %c0_10] : memref<1x1x128xf32, #tpu.memory_space<vmem>>, vector<1x1x128xf32>
    tpu.vector_store %arg7[%c0_8, %c0_9, %c0_10], %4 {strides = array<i32>} : memref<1x1x128xf32, #tpu.memory_space<vmem>>, vector<1x1x128xf32>,
    return
  }
  func.func @transform_0(%arg0: i32, %arg1: i32, %arg2: memref<4x32xi32, #tpu.memory_space<smem>>, %arg3: memref<4x32xi32, #tpu.memory_space<smem>>) -> (i32, i32, i32) {
    %0 = arith.index_cast %arg0 : i32 to index
    %1 = arith.index_cast %arg1 : i32 to index
    %2 = memref.load %arg2[%0, %1] : memref<4x32xi32, #tpu.memory_space<smem>>
    %c0_i32 = arith.constant 0 : i32
    %c0_i32_0 = arith.constant 0 : i32
    %c0_i32_1 = arith.constant 0 : i32
    return %2, %c0_i32, %c0_i32_0 : i32, i32, i32
  }
  func.func @transform_1(%arg0: i32, %arg1: i32, %arg2: memref<4x32xi32, #tpu.memory_space<smem>>, %arg3: memref<4x32xi32, #tpu.memory_space<smem>>) -> (i32, i32, i32) {
    %0 = arith.index_cast %arg0 : i32 to index
    %1 = arith.index_cast %arg1 : i32 to index
    %2 = memref.load %arg3[%0, %1] : memref<4x32xi32, #tpu.memory_space<smem>>
    %c0_i32 = arith.constant 0 : i32
    %c0_i32_0 = arith.constant 0 : i32
    %c0_i32_1 = arith.constant 0 : i32
    return %2, %c0_i32, %c0_i32_0 : i32, i32, i32
  }
  func.func @transform_2(%arg0: i32, %arg1: i32, %arg2: memref<4x32xi32, #tpu.memory_space<smem>>, %arg3: memref<4x32xi32, #tpu.memory_space<smem>>) -> (i32, i32, i32) {
    %c0_i32 = arith.constant 0 : i32
    %c0_i32_0 = arith.constant 0 : i32
    %c0_i32_1 = arith.constant 0 : i32
    return %arg1, %c0_i32, %c0_i32_0 : i32, i32, i32
  }
  func.func @transform_3(%arg0: i32, %arg1: i32, %arg2: memref<4x32xi32, #tpu.memory_space<smem>>, %arg3: memref<4x32xi32, #tpu.memory_space<smem>>) -> (i32, i32, i32) {
    %c32_i32 = arith.constant 32 : i32
    %0 = arith.muli %arg0, %c32_i32 : i32
    %1 = arith.addi %0, %arg1 : i32
    %c0_i32 = arith.constant 0 : i32
    %c0_i32_0 = arith.constant 0 : i32
    %c0_i32_1 = arith.constant 0 : i32
    return %1, %c0_i32, %c0_i32_0 : i32, i32, i32
  }
}

</mosaic_0001>

<llo_original>
// kernel: tpu_custom_call.1
$region0: #{tpu_custom_call.1}
  #allocation0 [shape = 'u32[]', space=smem, size = 0x4, offset = 0x4, fixed_abs, tag = 'smem constant byte address 0x4 - core index']
  #allocation1 [shape = 'u32[144,128]{1,0:T(1,128)}', space=vmem, size = 0x12000, scoped, tag = 'internal scratch']
  #allocation2 [shape = 's32[1]{0}', space=sflag, size = 0x4, scoped, tag = 'scoped memory for tpu_custom_call.1']
  #allocation3 [shape = 'u8[2048]{0}', space=smem, size = 0x800, scoped, tag = 'prefetched SMEM operand 0']
  #allocation4 [shape = 'u8[2048]{0}', space=smem, size = 0x800, scoped, tag = 'prefetched SMEM operand 1']
  %s0 = inlined_call_operand.hbm [shape: s32[4,32], index: 0, kind: input, shape index: {}]
  %s1 = inlined_call_operand.hbm [shape: s32[4,32], index: 1, kind: input, shape index: {}]
  %s2 = inlined_call_operand.hbm [shape: f32[128,1,128], index: 2, kind: input, shape index: {}]
  %s3 = inlined_call_operand.vmem [shape: f32[8,1,128], index: 3, kind: input, shape index: {}]
  %s4 = inlined_call_operand.hbm [shape: f32[32,1,128], index: 4, kind: input, shape index: {}]
  %s5 = inlined_call_operand.hbm [shape: f32[128,1,128], index: 5, kind: output, shape index: {}]
  %s6 = sld [smem:[#allocation0]]
  $region53: #{tpu_custom_call.1} parent=0
    _
  %s8 = ssub.s32 1, %s6
  %s9 = scalar_select 0, %s8, %s6
  %11 = dma.hbm_to_smem %s0, 64, [#allocation3], [#allocation2]
  %13 = dma.hbm_to_smem %s1, 64, [#allocation4], [#allocation2]
  %14 = dma.done [#allocation2], 128
  %15 = sfence
  $region1: #{tpu_custom_call.1} parent=0
    #allocation5 [shape = 'u8[1024]{0}', space=vmem, size = 0x400, scoped, tag = 'input window, operand 2']
    #allocation6 [shape = 's32[2]{0}', space=sflag, size = 0x8, scoped, tag = 'scoped memory for tpu_custom_call.1']
    #allocation7 [shape = 's32[2]{0}', space=sflag, size = 0x8, scoped, tag = 'scoped memory for tpu_custom_call.1']
    #allocation8 [shape = 'u8[1024]{0}', space=vmem, size = 0x400, scoped, tag = 'input window, operand 4']
    #allocation9 [shape = 's32[2]{0}', space=sflag, size = 0x8, scoped, tag = 'scoped memory for tpu_custom_call.1']
    #allocation10 [shape = 'u8[1024]{0}', space=vmem, size = 0x400, scoped, tag = 'output window, operand 0']
    %16 = vsyncpa [#allocation6], 0
    %s17 = scalar_lea.sflag [#allocation6], 1
    %18 = vsyncpa %s17, 0
    %19 = vsyncpa [#allocation9], 0
    %s20 = scalar_lea.sflag [#allocation9], 1
    %21 = vsyncpa %s20, 0
    %22 = vsyncpa [#allocation7], 0
    %s23 = scalar_lea.sflag [#allocation7], 1
    %24 = vsyncpa %s23, 0
    loop: start=0, step=1, limit=130
    $region2: #{tpu_custom_call.1} parent=1 // loop_pre_header
      _
    $region3: #{tpu_custom_call.1} parent=1 // loop_header
      %s26 = sphi 0, %s30
      %p27 = scmp.ge.s32.totalorder %s26, 130
      %s33 = sphi 0, %s45
      %s34 = sphi 0, %s41
      %s35 = sphi 0, %s33
      %s36 = sphi 0, %s34
      %s37 = sphi 0, %s35
      %s38 = sphi 0, %s36
      %s64 = sphi 0, %s66
      %s67 = sphi 0, %s64
      %s68 = sphi 0, %s67
      %s84 = sphi 0, %s68
      %s106 = sphi 0, %s108
      %s109 = sphi 0, %s106
      %s110 = sphi 0, %s109
      %s126 = sphi 0, %s110
      %s132 = sphi 0, %s134
      %s135 = sphi 0, %s132
      %s136 = sphi 0, %s135
      %s152 = sphi 0, %s136
      %s162 = sphi 0, %s164
      %s165 = sphi 0, %s162
      %s166 = sphi 0, %s165
      %s182 = sphi 0, %s166
    $region4: #{tpu_custom_call.1} parent=1 // loop_header_branch
      %29 = sbr.rel (%p27) target = $region8
    $region5: #{tpu_custom_call.1} parent=1 // loop_body
      %s31 = ssub.s32 %s26, 1
      %s32 = ssub.s32 %s26, 2
      %s39 = sadd.s32 1, %s34
      %p40 = scmp.ge.s32.totalorder %s39, 32
      %s41 = scalar_select %p40, 0, %s39
      %s42 = sadd.s32 1, %s33
      %s43 = scalar_select %p40, %s42, %s33
      %p44 = scmp.ge.s32.totalorder %s43, 4
      %s45 = scalar_select %p44, 0, %s43
      %s46 = sshra.s32 %s34, 7
      %s47 = sand.u32 %s34, 127
      %s48 = sadd.s32 %s46, %s33
      %s49 = smul.u32 %s48, 128
      %s50 = sshra.s32 %s34, 7
      %s51 = sand.u32 %s34, 127
      %s52 = sadd.s32 %s49, %s51
      %s53 = sld [smem:[#allocation3 + %s52]]
      %s54 = sshra.s32 %s41, 7
      %s55 = sand.u32 %s41, 127
      %s56 = sadd.s32 %s54, %s45
      %s57 = smul.u32 %s56, 128
      %s58 = sshra.s32 %s41, 7
      %s59 = sand.u32 %s41, 127
      %s60 = sadd.s32 %s57, %s59
      %s61 = sld [smem:[#allocation3 + %s60]]
      %s62 = ssub.s32 %s53, %s61
      %p63 = scmp.eq.s32.totalorder %s62, 0
      %s65 = sadd.s32 %s64, 1
      %s66 = scalar_select %p63, %s64, %s65
      %p69 = pneg %p63
      %p70 = scmp.eq.s32.totalorder %s26, 127
      %p71 = por %p69, %p70
      %p72 = scmp.ne.s32.totalorder %s64, %s67
      %p73 = scmp.eq.s32.totalorder %s26, 0
      %p74 = por %p72, %p73
      %p75 = scmp.ne.s32.totalorder %s64, %s67
      %p76 = scmp.eq.s32.totalorder %s31, 127
      %p77 = por %p75, %p76
      %p78 = scmp.ne.s32.totalorder %s67, %s68
      %p79 = scmp.eq.s32.totalorder %s31, 0
      %p80 = por %p78, %p79
      %p81 = scmp.ne.s32.totalorder %s67, %s68
      %p82 = scmp.eq.s32.totalorder %s32, 127
      %p83 = por %p81, %p82
      %p85 = scmp.ne.s32.totalorder %s68, %s84
      %p86 = scmp.eq.s32.totalorder %s32, 0
      %p87 = por %p85, %p86
      %s88 = sshra.s32 %s34, 7
      %s89 = sand.u32 %s34, 127
      %s90 = sadd.s32 %s88, %s33
      %s91 = smul.u32 %s90, 128
      %s92 = sshra.s32 %s34, 7
      %s93 = sand.u32 %s34, 127
      %s94 = sadd.s32 %s91, %s93
      %s95 = sld [smem:[#allocation4 + %s94]]
      %s96 = sshra.s32 %s41, 7
      %s97 = sand.u32 %s41, 127
      %s98 = sadd.s32 %s96, %s45
      %s99 = smul.u32 %s98, 128
      %s100 = sshra.s32 %s41, 7
      %s101 = sand.u32 %s41, 127
      %s102 = sadd.s32 %s99, %s101
      %s103 = sld [smem:[#allocation4 + %s102]]
      %s104 = ssub.s32 %s95, %s103
      %p105 = scmp.eq.s32.totalorder %s104, 0
      %s107 = sadd.s32 %s106, 1
      %s108 = scalar_select %p105, %s106, %s107
      %p111 = pneg %p105
      %p112 = scmp.eq.s32.totalorder %s26, 127
      %p113 = por %p111, %p112
      %p114 = scmp.ne.s32.totalorder %s106, %s109
      %p115 = scmp.eq.s32.totalorder %s26, 0
      %p116 = por %p114, %p115
      %p117 = scmp.ne.s32.totalorder %s106, %s109
      %p118 = scmp.eq.s32.totalorder %s31, 127
      %p119 = por %p117, %p118
      %p120 = scmp.ne.s32.totalorder %s109, %s110
      %p121 = scmp.eq.s32.totalorder %s31, 0
      %p122 = por %p120, %p121
      %p123 = scmp.ne.s32.totalorder %s109, %s110
      %p124 = scmp.eq.s32.totalorder %s32, 127
      %p125 = por %p123, %p124
      %p127 = scmp.ne.s32.totalorder %s110, %s126
      %p128 = scmp.eq.s32.totalorder %s32, 0
      %p129 = por %p127, %p128
      %s130 = ssub.s32 %s34, %s41
      %p131 = scmp.eq.s32.totalorder %s130, 0
      %s133 = sadd.s32 %s132, 1
      %s134 = scalar_select %p131, %s132, %s133
      %p137 = pneg %p131
      %p138 = scmp.eq.s32.totalorder %s26, 127
      %p139 = por %p137, %p138
      %p140 = scmp.ne.s32.totalorder %s132, %s135
      %p141 = scmp.eq.s32.totalorder %s26, 0
      %p142 = por %p140, %p141
      %p143 = scmp.ne.s32.totalorder %s132, %s135
      %p144 = scmp.eq.s32.totalorder %s31, 127
      %p145 = por %p143, %p144
      %p146 = scmp.ne.s32.totalorder %s135, %s136
      %p147 = scmp.eq.s32.totalorder %s31, 0
      %p148 = por %p146, %p147
      %p149 = scmp.ne.s32.totalorder %s135, %s136
      %p150 = scmp.eq.s32.totalorder %s32, 127
      %p151 = por %p149, %p150
      %p153 = scmp.ne.s32.totalorder %s136, %s152
      %p154 = scmp.eq.s32.totalorder %s32, 0
      %p155 = por %p153, %p154
      %s156 = smul.u32 %s33, 32
      %s157 = sadd.s32 %s156, %s34
      %s158 = smul.u32 %s45, 32
      %s159 = sadd.s32 %s158, %s41
      %s160 = ssub.s32 %s157, %s159
      %p161 = scmp.eq.s32.totalorder %s160, 0
      %s163 = sadd.s32 %s162, 1
      %s164 = scalar_select %p161, %s162, %s163
      %p167 = pneg %p161
      %p168 = scmp.eq.s32.totalorder %s26, 127
      %p169 = por %p167, %p168
      %p170 = scmp.ne.s32.totalorder %s162, %s165
      %p171 = scmp.eq.s32.totalorder %s26, 0
      %p172 = por %p170, %p171
      %p173 = scmp.ne.s32.totalorder %s162, %s165
      %p174 = scmp.eq.s32.totalorder %s31, 127
      %p175 = por %p173, %p174
      %p176 = scmp.ne.s32.totalorder %s165, %s166
      %p177 = scmp.eq.s32.totalorder %s31, 0
      %p178 = por %p176, %p177
      %p179 = scmp.ne.s32.totalorder %s165, %s166
      %p180 = scmp.eq.s32.totalorder %s32, 127
      %p181 = por %p179, %p180
      %p183 = scmp.ne.s32.totalorder %s166, %s182
      %p184 = scmp.eq.s32.totalorder %s32, 0
      %p185 = por %p183, %p184
      %p186 = scmp.le.s32.totalorder 1, %s26
      %p187 = scmp.lt.s32.totalorder %s26, 129
      %p188 = pnand %p186, %p187
      %p189 = pneg %p188
      // Predicated region
      $region9: #{tpu_custom_call.1} parent=5 // pred_check
        _
      $region10: #{tpu_custom_call.1} parent=5 // pred_check_branch
        %191 = sbr.rel (%p188) target = $region12
      $region11: #{tpu_custom_call.1} parent=5 // pred_region
        %s192 = ssub.s32 %s26, 1
      $region12: #{tpu_custom_call.1} parent=5 // pred_fallthru
        _
      %p193 = scmp.lt.s32.totalorder %s26, 128
      // Predicated region
      $region13: #{tpu_custom_call.1} parent=5 // pred_check
        %p194 = pneg %p193
      $region14: #{tpu_custom_call.1} parent=5 // pred_check_branch
        %196 = sbr.rel (%p194) target = $region16
      $region15: #{tpu_custom_call.1} parent=5 // pred_region
        // Predicated region
        $region17: #{tpu_custom_call.1} parent=15 // pred_check
          %p197 = pneg %p74
        $region18: #{tpu_custom_call.1} parent=15 // pred_check_branch
          %199 = sbr.rel (%p197) target = $region20
        $region19: #{tpu_custom_call.1} parent=15 // pred_region
          %s200 = sand.u32 %s64, 1
          %s201 = scalar_lea.sflag [#allocation6], %s200
          %s202 = sand.u32 %s64, 1
          %s203 = scalar_lea.vmem [#allocation5], %s202
          %s204 = sshra.s32 %s34, 7
          %s205 = sand.u32 %s34, 127
          %s206 = sadd.s32 %s204, %s33
          %s207 = smul.u32 %s206, 128
          %s208 = sshra.s32 %s34, 7
          %s209 = sand.u32 %s34, 127
          %s210 = sadd.s32 %s207, %s209
          %s211 = sld [smem:[#allocation3 + %s210]]
          %s213 = ssub.s32 16, 16
          %214 = vsyncadd %s201, %s213
          %s215 = smul.addr %s211, 16
          %s216 = scalar_lea.hbm %s2, %s215
          %s218 = sshll.u32 %s203, 4
          %s219 = int_to_ptr.vmem [resolvable:$true] %s218
          %221 = dma.hbm_to_vmem [thread:$0]  %s216, 16, %s219, %s201
        $region20: #{tpu_custom_call.1} parent=15 // pred_fallthru
          _
        // Predicated region
        $region21: #{tpu_custom_call.1} parent=15 // pred_check
          %p222 = pneg %p116
        $region22: #{tpu_custom_call.1} parent=15 // pred_check_branch
          %224 = sbr.rel (%p222) target = $region24
        $region23: #{tpu_custom_call.1} parent=15 // pred_region
          %s225 = sshra.s32 %s34, 7
          %s226 = sand.u32 %s34, 127
          %s227 = sadd.s32 %s225, %s33
          %s228 = smul.u32 %s227, 128
          %s229 = sshra.s32 %s34, 7
          %s230 = sand.u32 %s34, 127
          %s231 = sadd.s32 %s228, %s230
          %s232 = sld [smem:[#allocation4 + %s231]]
          %p233 = scmp.lt.s32.totalorder %s232, 7
          %s234 = scalar_select %p233, %s232, 7
          %s235 = scalar_lea.vmem %s3, %s234
          %s236 = sshra.s32 %s34, 7
          %s237 = sand.u32 %s34, 127
          %s238 = sadd.s32 %s236, %s33
          %s239 = smul.u32 %s238, 128
          %s240 = sshra.s32 %s34, 7
          %s241 = sand.u32 %s34, 127
          %s242 = sadd.s32 %s239, %s241
          %s243 = sld [smem:[#allocation4 + %s242]]
        $region24: #{tpu_custom_call.1} parent=15 // pred_fallthru
          _
        // Predicated region
        $region25: #{tpu_custom_call.1} parent=15 // pred_check
          %p244 = pneg %p142
        $region26: #{tpu_custom_call.1} parent=15 // pred_check_branch
          %246 = sbr.rel (%p244) target = $region28
        $region27: #{tpu_custom_call.1} parent=15 // pred_region
          %s247 = sand.u32 %s132, 1
          %s248 = scalar_lea.sflag [#allocation9], %s247
          %s249 = sand.u32 %s132, 1
          %s250 = scalar_lea.vmem [#allocation8], %s249
          %s252 = ssub.s32 16, 16
          %253 = vsyncadd %s248, %s252
          %s254 = smul.addr %s34, 16
          %s255 = scalar_lea.hbm %s4, %s254
          %s257 = sshll.u32 %s250, 4
          %s258 = int_to_ptr.vmem [resolvable:$true] %s257
          %260 = dma.hbm_to_vmem [thread:$0]  %s255, 16, %s258, %s248
        $region28: #{tpu_custom_call.1} parent=15 // pred_fallthru
          _
      $region16: #{tpu_custom_call.1} parent=5 // pred_fallthru
        _
      %p261 = scmp.le.s32.totalorder 1, %s26
      %p262 = scmp.lt.s32.totalorder %s26, 129
      %p263 = pnand %p261, %p262
      %p264 = pneg %p263
      // Predicated region
      $region29: #{tpu_custom_call.1} parent=5 // pred_check
        _
      $region30: #{tpu_custom_call.1} parent=5 // pred_check_branch
        %266 = sbr.rel (%p263) target = $region32
      $region31: #{tpu_custom_call.1} parent=5 // pred_region
        %s267 = ssub.s32 %s26, 1
        %s268 = sand.u32 %s67, 1
        %s269 = scalar_lea.sflag [#allocation6], %s268
        %s270 = sand.u32 %s67, 1
        %s271 = scalar_lea.vmem [#allocation5], %s270
        // Predicated region
        $region33: #{tpu_custom_call.1} parent=31 // pred_check
          %p272 = pneg %p80
        $region34: #{tpu_custom_call.1} parent=31 // pred_check_branch
          %274 = sbr.rel (%p272) target = $region36
        $region35: #{tpu_custom_call.1} parent=31 // pred_region
          %275 = dma.done %s269, 16
        $region36: #{tpu_custom_call.1} parent=31 // pred_fallthru
          _
        %s276 = sand.u32 %s135, 1
        %s277 = scalar_lea.sflag [#allocation9], %s276
        %s278 = sand.u32 %s135, 1
        %s279 = scalar_lea.vmem [#allocation8], %s278
        // Predicated region
        $region37: #{tpu_custom_call.1} parent=31 // pred_check
          %p280 = pneg %p148
        $region38: #{tpu_custom_call.1} parent=31 // pred_check_branch
          %282 = sbr.rel (%p280) target = $region40
        $region39: #{tpu_custom_call.1} parent=31 // pred_region
          %283 = dma.done %s277, 16
        $region40: #{tpu_custom_call.1} parent=31 // pred_fallthru
          _
        %s284 = sand.u32 %s67, 1
        %s285 = scalar_lea.sflag [#allocation6], %s284
        %s286 = sand.u32 %s67, 1
        %s287 = scalar_lea.vmem [#allocation5], %s286
        %p288 = pneg %p80
        %p289 = pneg %p77
        %s290 = sshra.s32 %s36, 7
        %s291 = sand.u32 %s36, 127
        %s292 = sadd.s32 %s290, %s35
        %s293 = smul.u32 %s292, 128
        %s294 = sshra.s32 %s36, 7
        %s295 = sand.u32 %s36, 127
        %s296 = sadd.s32 %s293, %s295
        %s297 = sld [smem:[#allocation4 + %s296]]
        %p298 = scmp.lt.s32.totalorder %s297, 7
        %s299 = scalar_select %p298, %s297, 7
        %s300 = scalar_lea.vmem %s3, %s299
        %p301 = pneg %p122
        %p302 = pneg %p119
        %s303 = sand.u32 %s135, 1
        %s304 = scalar_lea.sflag [#allocation9], %s303
        %s305 = sand.u32 %s135, 1
        %s306 = scalar_lea.vmem [#allocation8], %s305
        %p307 = pneg %p148
        %p308 = pneg %p145
        %p309 = pneg %p178
        %p310 = pneg %p175
        %s311 = sand.u32 %s165, 1
        %s312 = scalar_lea.sflag [#allocation7], %s311
        %s313 = sand.u32 %s165, 1
        %s314 = scalar_lea.vmem [#allocation10], %s313
        %s315 = sshra.s32 %s36, 7
        %s316 = sand.u32 %s36, 127
        %s317 = sadd.s32 %s315, %s35
        %s318 = smul.u32 %s317, 128
        %s319 = sshra.s32 %s36, 7
        %s320 = sand.u32 %s36, 127
        %s321 = sadd.s32 %s318, %s320
        %s322 = sld [smem:[#allocation3 + %s321]]
        %s323 = sshra.s32 %s36, 7
        %s324 = sand.u32 %s36, 127
        %s325 = sadd.s32 %s323, %s35
        %s326 = smul.u32 %s325, 128
        %s327 = sshra.s32 %s36, 7
        %s328 = sand.u32 %s36, 127
        %s329 = sadd.s32 %s326, %s328
        %s330 = sld [smem:[#allocation4 + %s329]]
        %p331 = scmp.lt.s32.totalorder %s330, 7
        %s332 = scalar_select %p331, %s330, 7
        %s333 = scalar_lea.vmem %s3, %s332
        %s334 = sshra.s32 %s36, 7
        %s335 = sand.u32 %s36, 127
        %s336 = sadd.s32 %s334, %s35
        %s337 = smul.u32 %s336, 128
        %s338 = sshra.s32 %s36, 7
        %s339 = sand.u32 %s36, 127
        %s340 = sadd.s32 %s337, %s339
        %s341 = sld [smem:[#allocation4 + %s340]]
        %s342 = smul.u32 %s35, 32
        %s343 = sadd.s32 %s342, %s36
        %v344 = vld [vmem:[%s271] sm:$0x1]
        %v345 = vld [vmem:[%s333] sm:$0x1]
        %v346 = vadd.f32 %v344, %v345
        %v347 = vld [vmem:[%s279] sm:$0x1]
        %v348 = vadd.f32 %v346, %v347
        %349 = vst [vmem:[%s314] sm:$0x1] %v348
        %s350 = sand.u32 %s165, 1
        %s351 = scalar_lea.sflag [#allocation7], %s350
        %s352 = sand.u32 %s165, 1
        %s353 = scalar_lea.vmem [#allocation10], %s352
        // Predicated region
        $region41: #{tpu_custom_call.1} parent=31 // pred_check
          %p354 = pneg %p175
        $region42: #{tpu_custom_call.1} parent=31 // pred_check_branch
          %356 = sbr.rel (%p354) target = $region44
        $region43: #{tpu_custom_call.1} parent=31 // pred_region
          %s357 = smul.u32 %s35, 32
          %s358 = sadd.s32 %s357, %s36
          %s360 = ssub.s32 16, 16
          %361 = vsyncadd %s351, %s360
          %s362 = smul.addr %s358, 16
          %s363 = scalar_lea.hbm %s5, %s362
          %s365 = sshll.u32 %s353, 4
          %s366 = int_to_ptr.vmem [resolvable:$true] %s365
          %368 = dma.vmem_to_hbm [thread:$0]  %s366, 16, %s363, %s351
        $region44: #{tpu_custom_call.1} parent=31 // pred_fallthru
          _
      $region32: #{tpu_custom_call.1} parent=5 // pred_fallthru
        _
      %p369 = scmp.le.s32.totalorder 2, %s26
      // Predicated region
      $region45: #{tpu_custom_call.1} parent=5 // pred_check
        %p370 = pneg %p369
      $region46: #{tpu_custom_call.1} parent=5 // pred_check_branch
        %372 = sbr.rel (%p370) target = $region48
      $region47: #{tpu_custom_call.1} parent=5 // pred_region
        %s373 = ssub.s32 %s26, 2
        // Predicated region
        $region49: #{tpu_custom_call.1} parent=47 // pred_check
          %p374 = pneg %p181
        $region50: #{tpu_custom_call.1} parent=47 // pred_check_branch
          %376 = sbr.rel (%p374) target = $region52
        $region51: #{tpu_custom_call.1} parent=47 // pred_region
          %s377 = sand.u32 %s166, 1
          %s378 = scalar_lea.sflag [#allocation7], %s377
          %s379 = sand.u32 %s166, 1
          %s380 = scalar_lea.vmem [#allocation10], %s379
          %381 = dma.done %s378, 16
        $region52: #{tpu_custom_call.1} parent=47 // pred_fallthru
          _
      $region48: #{tpu_custom_call.1} parent=5 // pred_fallthru
        _
    $region6: #{tpu_custom_call.1} parent=1 // loop_footer
      %s30 = sadd.s32 1, %s26
    $region7: #{tpu_custom_call.1} parent=1 // loop_footer_branch
      %25 = sbr.rel target = $region3
    $region8: #{tpu_custom_call.1} parent=1 // loop_exit
      _
    %382 = vsyncpa [#allocation6], 1
    %s383 = scalar_lea.sflag [#allocation6], 1
    %384 = vsyncpa %s383, 1
    %385 = vsyncpa [#allocation9], 1
    %s386 = scalar_lea.sflag [#allocation9], 1
    %387 = vsyncpa %s386, 1
    %388 = vsyncpa [#allocation7], 1
    %s389 = scalar_lea.sflag [#allocation7], 1
    %390 = vsyncpa %s389, 1

</llo_original>
